<compile_context>
chip_gen: v5e
topology: v5e:2x2
jax: 0.10.0
libtpu: 0.0.40
codegen_flags: <defaults>
</compile_context>

<pallas_src>
import functools

import jax
import jax.numpy as jnp
from jax.experimental import pallas as pl
from jax.experimental.pallas import tpu as pltpu


def _swiglu_kernel(x_ref, w1t_ref, w3t_ref, w2t_ref, o_ref, acc_ref):
    # x_ref:   (tm, d_model)     row tile (constant across the reduction axis)
    # w1t_ref: (d_model, tf)     W1^T tile
    # w3t_ref: (d_model, tf)     W3^T tile
    # w2t_ref: (tf, d_model)     W2^T tile
    # o_ref:   (tm, d_model)
    # acc_ref: (tm, d_model) f32 accumulator, resident across the reduction axis
    k = pl.program_id(1)

    @pl.when(k == 0)
    def _():
        acc_ref[...] = jnp.zeros_like(acc_ref)

    x = x_ref[...]
    # x @ W1^T tile and x @ W3^T tile -> (tm, tf), f32 accumulation on the MXU.
    a = jnp.dot(x, w1t_ref[...], preferred_element_type=jnp.float32)
    b = jnp.dot(x, w3t_ref[...], preferred_element_type=jnp.float32)
    # SiLU(a) * b  (sigmoid goes to the EUP; elementwise on the VPU).
    h = (a * jax.nn.sigmoid(a)) * b
    # Partial contribution of this d_ff slice to the output.
    acc_ref[...] += jnp.dot(h.astype(w2t_ref.dtype), w2t_ref[...],
                            preferred_element_type=jnp.float32)

    @pl.when(k == pl.num_programs(1) - 1)
    def _():
        o_ref[...] = acc_ref[...].astype(o_ref.dtype)


def _round_up(x, m):
    return ((x + m - 1) // m) * m


@functools.partial(jax.jit, static_argnames=("tm_target", "tf_target"))
def swiglu(x, w1, w3, w2, *, tm_target=256, tf_target=512):
    """x: (..., d_model); w1/w3: (d_ff, d_model); w2: (d_model, d_ff)  (PyTorch (out, in))."""
    orig_shape = x.shape
    d_model = orig_shape[-1]
    d_ff = w1.shape[0]

    x2d = x.reshape(-1, d_model)
    M = x2d.shape[0]

    # Sublane granularity: 8 rows for 32-bit dtypes, 16 for 16-bit (packed sublanes).
    sub = 16 if jnp.dtype(x.dtype).itemsize < 4 else 8
    tm = _round_up(min(tm_target, _round_up(M, sub)), sub)
    M_pad = _round_up(M, tm)
    if M_pad != M:
        x2d = jnp.pad(x2d, ((0, M_pad - M), (0, 0)))

    # Reduction tile over d_ff: largest lane-aligned candidate dividing d_ff,
    # otherwise the full d_ff (valid when block dim == array dim).
    tf = d_ff
    for cand in (tf_target, 256, 128):
        if d_ff % cand == 0:
            tf = cand
            break

    # One-time wrapper-side transposes so the kernel never transposes weight tiles.
    w1t = w1.T   # (d_model, d_ff)
    w3t = w3.T   # (d_model, d_ff)
    w2t = w2.T   # (d_ff, d_model)

    grid = (M_pad // tm, d_ff // tf)

    itemsize = jnp.dtype(x.dtype).itemsize
    cost = pl.CostEstimate(
        flops=6 * M_pad * d_model * d_ff,            # three matmuls
        transcendentals=M_pad * d_ff,                # sigmoid
        bytes_accessed=(M_pad * d_model * itemsize                       # x
                        + 2 * d_ff * d_model * jnp.dtype(w1.dtype).itemsize  # W1, W3
                        + d_model * d_ff * jnp.dtype(w2.dtype).itemsize      # W2
                        + M_pad * d_model * itemsize),                   # out
    )

    out = pl.pallas_call(
        _swiglu_kernel,
        out_shape=jax.ShapeDtypeStruct((M_pad, d_model), x.dtype),
        grid_spec=pltpu.PrefetchScalarGridSpec(
            num_scalar_prefetch=0,
            grid=grid,
            in_specs=[
                pl.BlockSpec((tm, d_model), lambda i, k: (i, 0)),
                pl.BlockSpec((d_model, tf), lambda i, k: (0, k)),
                pl.BlockSpec((d_model, tf), lambda i, k: (0, k)),
                pl.BlockSpec((tf, d_model), lambda i, k: (k, 0)),
            ],
            out_specs=pl.BlockSpec((tm, d_model), lambda i, k: (i, 0)),
            scratch_shapes=[pltpu.VMEM((tm, d_model), jnp.float32)],
        ),
        compiler_params=pltpu.CompilerParams(
            dimension_semantics=("parallel", "arbitrary")),
        cost_estimate=cost,
    )(x2d, w1t, w3t, w2t)

    out = out[:M]
    return out.reshape(orig_shape)


def _trunc_normal_weight(key, out_features, in_features, dtype=jnp.float32):
    # Matches Linear.__init__: sigma = 2 / sqrt(in + out), truncated at +/- 3 sigma.
    sigma = 2.0 / (in_features + out_features) ** 0.5
    w = jax.random.truncated_normal(
        key, -3.0, 3.0, (out_features, in_features), dtype=jnp.float32) * sigma
    return w.astype(dtype)


def _swiglu_reference(x, w1, w3, w2):
    a = jnp.einsum('...i,oi->...o', x, w1)
    b = jnp.einsum('...i,oi->...o', x, w3)
    h = (a * jax.nn.sigmoid(a)) * b
    return jnp.einsum('...f,of->...o', h, w2)


if __name__ == "__main__":
    # Small demo shapes; d_model is a multiple of 128 so the output tile is lane-dense.
    batch, seq, d_model, d_ff = 2, 8, 128, 256
    key = jax.random.PRNGKey(0)
    kx, k1, k2, k3 = jax.random.split(key, 4)

    x = jax.random.normal(kx, (batch, seq, d_model), dtype=jnp.float32)
    w1 = _trunc_normal_weight(k1, d_ff, d_model)     # (d_ff, d_model)
    w2 = _trunc_normal_weight(k2, d_model, d_ff)     # (d_model, d_ff)
    w3 = _trunc_normal_weight(k3, d_ff, d_model)     # (d_ff, d_model)

    out = swiglu(x, w1, w3, w2)
    out = jax.block_until_ready(out)

    ref = _swiglu_reference(x, w1, w3, w2)
    assert out.shape == (batch, seq, d_model)
    assert jnp.allclose(out, ref, atol=1e-4, rtol=1e-4), float(jnp.abs(out - ref).max())

    print("KERNEL_OK")
</pallas_src>

<mosaic_0001>
module attributes {stable_mosaic.version = 11 : i64} {
  func.func @_swiglu_kernel(%arg0: i32, %arg1: i32, %arg2: memref<16x128xf32, #tpu.memory_space<vmem>>, %arg3: memref<128x256xf32, #tpu.memory_space<vmem>>, %arg4: memref<128x256xf32, #tpu.memory_space<vmem>>, %arg5: memref<256x128xf32, #tpu.memory_space<vmem>>, %arg6: memref<16x128xf32, #tpu.memory_space<vmem>>, %arg7: memref<16x128xf32, #tpu.memory_space<vmem>>) attributes {dimension_semantics = [#tpu.dimension_semantics<parallel>, #tpu.dimension_semantics<arbitrary>], iteration_bounds = array<i64: 1, 1>, scalar_prefetch = 0 : i64, scratch_operands = 1 : i64, tpu.core_type = #tpu.core_type<tc>, window_params = [{transform_indices = @transform_0, window_bounds = array<i64: 16, 128>}, {transform_indices = @transform_1, window_bounds = array<i64: 128, 256>}, {transform_indices = @transform_2, window_bounds = array<i64: 128, 256>}, {transform_indices = @transform_3, window_bounds = array<i64: 256, 128>}, {transform_indices = @transform_4, window_bounds = array<i64: 16, 128>}]} {
    %c0_i32 = arith.constant 0 : i32
    %0 = arith.cmpi eq, %arg1, %c0_i32 : i32
    %1 = arith.extui %0 : i1 to i32
    %c0_i32_0 = arith.constant 0 : i32
    %2 = arith.cmpi ne, %1, %c0_i32_0 : i32
    scf.if %2 {
      %cst_17 = arith.constant 0.000000e+00 : f32
      %23 = vector.broadcast %cst_17 : f32 to vector<16x128xf32>
      %c0_18 = arith.constant 0 : index
      %c0_19 = arith.constant 0 : index
      %24 = vector.load %arg7[%c0_18, %c0_19] : memref<16x128xf32, #tpu.memory_space<vmem>>, vector<16x128xf32>
      tpu.vector_store %arg7[%c0_18, %c0_19], %23 {strides = array<i32>} : memref<16x128xf32, #tpu.memory_space<vmem>>, vector<16x128xf32>,
    } else {
    }
    %c0 = arith.constant 0 : index
    %c0_1 = arith.constant 0 : index
    %3 = vector.load %arg2[%c0, %c0_1] : memref<16x128xf32, #tpu.memory_space<vmem>>, vector<16x128xf32>
    %c0_2 = arith.constant 0 : index
    %c0_3 = arith.constant 0 : index
    %4 = vector.load %arg3[%c0_2, %c0_3] : memref<128x256xf32, #tpu.memory_space<vmem>>, vector<128x256xf32>
    %cst = arith.constant dense<0.000000e+00> : vector<16x256xf32>
    %5 = tpu.matmul %3, %4, %cst {dimension_numbers = #tpu.dot_dimension_numbers<[1], [0], [0], [1], [0, 0, 1, 1], [], []>} : vector<16x128xf32>, vector<128x256xf32>, vector<16x256xf32> -> vector<16x256xf32>
    %c0_4 = arith.constant 0 : index
    %c0_5 = arith.constant 0 : index
    %6 = vector.load %arg4[%c0_4, %c0_5] : memref<128x256xf32, #tpu.memory_space<vmem>>, vector<128x256xf32>
    %cst_6 = arith.constant dense<0.000000e+00> : vector<16x256xf32>
    %7 = tpu.matmul %3, %6, %cst_6 {dimension_numbers = #tpu.dot_dimension_numbers<[1], [0], [0], [1], [0, 0, 1, 1], [], []>} : vector<16x128xf32>, vector<128x256xf32>, vector<16x256xf32> -> vector<16x256xf32>
    %8 = arith.negf %5 : vector<16x256xf32>
    %9 = math.exp %8 : vector<16x256xf32>
    %cst_7 = arith.constant 1.000000e+00 : f32
    %10 = vector.broadcast %cst_7 : f32 to vector<16x256xf32>
    %11 = arith.addf %10, %9 : vector<16x256xf32>
    %12 = arith.divf %10, %11 : vector<16x256xf32>
    %13 = arith.mulf %5, %12 : vector<16x256xf32>
    %14 = arith.mulf %13, %7 : vector<16x256xf32>
    %c0_8 = arith.constant 0 : index
    %c0_9 = arith.constant 0 : index
    %15 = vector.load %arg7[%c0_8, %c0_9] : memref<16x128xf32, #tpu.memory_space<vmem>>, vector<16x128xf32>
    %c0_10 = arith.constant 0 : index
    %c0_11 = arith.constant 0 : index
    %16 = vector.load %arg5[%c0_10, %c0_11] : memref<256x128xf32, #tpu.memory_space<vmem>>, vector<256x128xf32>
    %cst_12 = arith.constant dense<0.000000e+00> : vector<16x128xf32>
    %17 = tpu.matmul %14, %16, %cst_12 {dimension_numbers = #tpu.dot_dimension_numbers<[1], [0], [0], [1], [0, 0, 1, 1], [], []>} : vector<16x256xf32>, vector<256x128xf32>, vector<16x128xf32> -> vector<16x128xf32>
    %18 = arith.addf %15, %17 : vector<16x128xf32>
    %c0_13 = arith.constant 0 : index
    %c0_14 = arith.constant 0 : index
    %19 = vector.load %arg7[%c0_13, %c0_14] : memref<16x128xf32, #tpu.memory_space<vmem>>, vector<16x128xf32>
    tpu.vector_store %arg7[%c0_13, %c0_14], %18 {strides = array<i32>} : memref<16x128xf32, #tpu.memory_space<vmem>>, vector<16x128xf32>,
    %c0_i32_15 = arith.constant 0 : i32
    %20 = arith.cmpi eq, %arg1, %c0_i32_15 : i32
    %21 = arith.extui %20 : i1 to i32
    %c0_i32_16 = arith.constant 0 : i32
    %22 = arith.cmpi ne, %21, %c0_i32_16 : i32
    scf.if %22 {
      %c0_17 = arith.constant 0 : index
      %c0_18 = arith.constant 0 : index
      %23 = vector.load %arg7[%c0_17, %c0_18] : memref<16x128xf32, #tpu.memory_space<vmem>>, vector<16x128xf32>
      %c0_19 = arith.constant 0 : index
      %c0_20 = arith.constant 0 : index
      %24 = vector.load %arg6[%c0_19, %c0_20] : memref<16x128xf32, #tpu.memory_space<vmem>>, vector<16x128xf32>
      tpu.vector_store %arg6[%c0_19, %c0_20], %23 {strides = array<i32>} : memref<16x128xf32, #tpu.memory_space<vmem>>, vector<16x128xf32>,
    } else {
    }
    return
  }
  func.func @transform_0(%arg0: i32, %arg1: i32) -> (i32, i32) {
    %c0_i32 = arith.constant 0 : i32
    %c0_i32_0 = arith.constant 0 : i32
    return %arg0, %c0_i32 : i32, i32
  }
  func.func @transform_1(%arg0: i32, %arg1: i32) -> (i32, i32) {
    %c0_i32 = arith.constant 0 : i32
    %c0_i32_0 = arith.constant 0 : i32
    return %c0_i32, %arg1 : i32, i32
  }
  func.func @transform_2(%arg0: i32, %arg1: i32) -> (i32, i32) {
    %c0_i32 = arith.constant 0 : i32
    %c0_i32_0 = arith.constant 0 : i32
    return %c0_i32, %arg1 : i32, i32
  }
  func.func @transform_3(%arg0: i32, %arg1: i32) -> (i32, i32) {
    %c0_i32 = arith.constant 0 : i32
    %c0_i32_0 = arith.constant 0 : i32
    return %arg1, %c0_i32 : i32, i32
  }
  func.func @transform_4(%arg0: i32, %arg1: i32) -> (i32, i32) {
    %c0_i32 = arith.constant 0 : i32
    %c0_i32_0 = arith.constant 0 : i32
    return %arg0, %c0_i32 : i32, i32
  }
}

</mosaic_0001>

<llo_original>
// kernel: swiglu.1
$region0: #{swiglu.1}
  #allocation0 [shape = 'u32[]', space=smem, size = 0x4, offset = 0x4, fixed_abs, tag = 'smem constant byte address 0x4 - core index']
  #allocation1 [shape = 'u32[72,128]{1,0:T(1,128)}', space=vmem, size = 0x9000, scoped, tag = 'internal scratch']
  #allocation2 [shape = 'f32[16,128]{1,0:T(8,128)}', space=vmem, size = 0x2000, scoped, tag = 'scratch operand']
  %s0 = inlined_call_operand.vmem [shape: f32[16,128], index: 0, kind: input, shape index: {}]
  %s1 = inlined_call_operand.vmem [shape: f32[128,256], index: 1, kind: input, shape index: {}]
  %s2 = inlined_call_operand.vmem [shape: f32[128,256], index: 2, kind: input, shape index: {}]
  %s3 = inlined_call_operand.vmem [shape: f32[256,128], index: 3, kind: input, shape index: {}]
  %s4 = inlined_call_operand.hbm [shape: f32[16,128], index: 4, kind: output, shape index: {}]
  %s5 = sld [smem:[#allocation0]]
  $region34: #{swiglu.1} parent=0
    _
  %s7 = ssub.s32 1, %s5
  %s8 = scalar_select 0, %s7, %s5
  $region1: #{swiglu.1} parent=0
    #allocation3 [shape = 'u8[8192]{0}', space=vmem, size = 0x2000, scoped, tag = 'output window, operand 0, single buffered']
    #allocation4 [shape = 's32[1]{0}', space=sflag, size = 0x4, scoped, tag = 'scoped memory for swiglu.1']
    %9 = vsyncpa [#allocation4], 0
    // Predicated region
    $region2: #{swiglu.1} parent=1 // pred_check
      _
    $region3: #{swiglu.1} parent=1 // pred_check_branch
      %11 = sbr.rel (0) target = $region5
    $region4: #{swiglu.1} parent=1 // pred_region
      _
    $region5: #{swiglu.1} parent=1 // pred_fallthru
      _
    // Predicated region
    $region6: #{swiglu.1} parent=1 // pred_check
      _
    $region7: #{swiglu.1} parent=1 // pred_check_branch
      %13 = sbr.rel (0) target = $region9
    $region8: #{swiglu.1} parent=1 // pred_region
      _
    $region9: #{swiglu.1} parent=1 // pred_fallthru
      _
    // Predicated region
    $region10: #{swiglu.1} parent=1 // pred_check
      _
    $region11: #{swiglu.1} parent=1 // pred_check_branch
      %15 = sbr.rel (0) target = $region13
    $region12: #{swiglu.1} parent=1 // pred_region
      _
    $region13: #{swiglu.1} parent=1 // pred_fallthru
      _
    // Predicated region
    $region14: #{swiglu.1} parent=1 // pred_check
      _
    $region15: #{swiglu.1} parent=1 // pred_check_branch
      %17 = sbr.rel (0) target = $region17
    $region16: #{swiglu.1} parent=1 // pred_region
      _
    $region17: #{swiglu.1} parent=1 // pred_fallthru
      _
    %p18 = scmp.eq.s32.totalorder 0, 0
    // Predicated region
    $region18: #{swiglu.1} parent=1 // pred_check
      %p19 = pneg %p18
    $region19: #{swiglu.1} parent=1 // pred_check_branch
      %21 = sbr.rel (%p19) target = $region21
    $region20: #{swiglu.1} parent=1 // pred_region
      %22 = vst [vmem:[#allocation2] sm:$0xff] 0.0
      %23 = vst [vmem:[#allocation2 + $0x8] sm:$0xff] 0.0
    $region21: #{swiglu.1} parent=1 // pred_fallthru
      _
    %v24 = vld [vmem:[%s0] sm:$0xff]
    %v25 = vld [vmem:[%s0 + $0x8] sm:$0xff]
    %v26 = vld [vmem:[%s1] sm:$0xff]
    %v27 = vld [vmem:[%s1 + $0x8] sm:$0xff]
    %v28 = vld [vmem:[%s1 + $0x10] sm:$0xff]
    %v29 = vld [vmem:[%s1 + $0x18] sm:$0xff]
    %v30 = vld [vmem:[%s1 + $0x20] sm:$0xff]
    %v31 = vld [vmem:[%s1 + $0x28] sm:$0xff]
    %v32 = vld [vmem:[%s1 + $0x30] sm:$0xff]
    %v33 = vld [vmem:[%s1 + $0x38] sm:$0xff]
    %v34 = vld [vmem:[%s1 + $0x40] sm:$0xff]
    %v35 = vld [vmem:[%s1 + $0x48] sm:$0xff]
    %v36 = vld [vmem:[%s1 + $0x50] sm:$0xff]
    %v37 = vld [vmem:[%s1 + $0x58] sm:$0xff]
    %v38 = vld [vmem:[%s1 + $0x60] sm:$0xff]
    %v39 = vld [vmem:[%s1 + $0x68] sm:$0xff]
    %v40 = vld [vmem:[%s1 + $0x70] sm:$0xff]
    %v41 = vld [vmem:[%s1 + $0x78] sm:$0xff]
    %v42 = vld [vmem:[%s1 + $0x80] sm:$0xff]
    %v43 = vld [vmem:[%s1 + $0x88] sm:$0xff]
    %v44 = vld [vmem:[%s1 + $0x90] sm:$0xff]
    %v45 = vld [vmem:[%s1 + $0x98] sm:$0xff]
    %v46 = vld [vmem:[%s1 + $0xa0] sm:$0xff]
    %v47 = vld [vmem:[%s1 + $0xa8] sm:$0xff]
    %v48 = vld [vmem:[%s1 + $0xb0] sm:$0xff]
    %v49 = vld [vmem:[%s1 + $0xb8] sm:$0xff]
    %v50 = vld [vmem:[%s1 + $0xc0] sm:$0xff]
    %v51 = vld [vmem:[%s1 + $0xc8] sm:$0xff]
    %v52 = vld [vmem:[%s1 + $0xd0] sm:$0xff]
    %v53 = vld [vmem:[%s1 + $0xd8] sm:$0xff]
    %v54 = vld [vmem:[%s1 + $0xe0] sm:$0xff]
    %v55 = vld [vmem:[%s1 + $0xe8] sm:$0xff]
    %v56 = vld [vmem:[%s1 + $0xf0] sm:$0xff]
    %v57 = vld [vmem:[%s1 + $0xf8] sm:$0xff]
    %58 = vmatpush.msra.mxu0 %v56
    %59 = vmatpush.msra.mxu0 %v54
    %60 = vmatpush.msra.mxu0 %v52
    %61 = vmatpush.msra.mxu0 %v50
    %62 = vmatpush.msra.mxu0 %v48
    %63 = vmatpush.msra.mxu0 %v46
    %64 = vmatpush.msra.mxu0 %v44
    %65 = vmatpush.msra.mxu0 %v42
    %66 = vmatpush.msra.mxu0 %v40
    %67 = vmatpush.msra.mxu0 %v38
    %68 = vmatpush.msra.mxu0 %v36
    %69 = vmatpush.msra.mxu0 %v34
    %70 = vmatpush.msra.mxu0 %v32
    %71 = vmatpush.msra.mxu0 %v30
    %72 = vmatpush.msra.mxu0 %v28
    %73 = vmatpush.msra.mxu0 %v26
    %74 = vmatmul.f32.gmra.mxu0 %v24
    %v75 = vpop.f32.mrf.mxu0
    %v76 = vadd.f32 0.0, %v75
    %77 = vmatmul.f32.gmra.mxu0 %v25
    %v78 = vpop.f32.mrf.mxu0
    %v79 = vadd.f32 0.0, %v78
    %80 = vdwg.mxu0
    %81 = vmatpush.msra.mxu0 %v57
    %82 = vmatpush.msra.mxu0 %v55
    %83 = vmatpush.msra.mxu0 %v53
    %84 = vmatpush.msra.mxu0 %v51
    %85 = vmatpush.msra.mxu0 %v49
    %86 = vmatpush.msra.mxu0 %v47
    %87 = vmatpush.msra.mxu0 %v45
    %88 = vmatpush.msra.mxu0 %v43
    %89 = vmatpush.msra.mxu0 %v41
    %90 = vmatpush.msra.mxu0 %v39
    %91 = vmatpush.msra.mxu0 %v37
    %92 = vmatpush.msra.mxu0 %v35
    %93 = vmatpush.msra.mxu0 %v33
    %94 = vmatpush.msra.mxu0 %v31
    %95 = vmatpush.msra.mxu0 %v29
    %96 = vmatpush.msra.mxu0 %v27
    %97 = vmatmul.f32.gmra.mxu0 %v24
    %v98 = vpop.f32.mrf.mxu0
    %v99 = vadd.f32 0.0, %v98
    %100 = vmatmul.f32.gmra.mxu0 %v25
    %v101 = vpop.f32.mrf.mxu0
    %v102 = vadd.f32 0.0, %v101
    %103 = vdwg.mxu0
    %v104 = vld [vmem:[%s2] sm:$0xff]
    %v105 = vld [vmem:[%s2 + $0x8] sm:$0xff]
    %v106 = vld [vmem:[%s2 + $0x10] sm:$0xff]
    %v107 = vld [vmem:[%s2 + $0x18] sm:$0xff]
    %v108 = vld [vmem:[%s2 + $0x20] sm:$0xff]
    %v109 = vld [vmem:[%s2 + $0x28] sm:$0xff]
    %v110 = vld [vmem:[%s2 + $0x30] sm:$0xff]
    %v111 = vld [vmem:[%s2 + $0x38] sm:$0xff]
    %v112 = vld [vmem:[%s2 + $0x40] sm:$0xff]
    %v113 = vld [vmem:[%s2 + $0x48] sm:$0xff]
    %v114 = vld [vmem:[%s2 + $0x50] sm:$0xff]
    %v115 = vld [vmem:[%s2 + $0x58] sm:$0xff]
    %v116 = vld [vmem:[%s2 + $0x60] sm:$0xff]
    %v117 = vld [vmem:[%s2 + $0x68] sm:$0xff]
    %v118 = vld [vmem:[%s2 + $0x70] sm:$0xff]
    %v119 = vld [vmem:[%s2 + $0x78] sm:$0xff]
    %v120 = vld [vmem:[%s2 + $0x80] sm:$0xff]
    %v121 = vld [vmem:[%s2 + $0x88] sm:$0xff]
    %v122 = vld [vmem:[%s2 + $0x90] sm:$0xff]
    %v123 = vld [vmem:[%s2 + $0x98] sm:$0xff]
    %v124 = vld [vmem:[%s2 + $0xa0] sm:$0xff]
    %v125 = vld [vmem:[%s2 + $0xa8] sm:$0xff]
    %v126 = vld [vmem:[%s2 + $0xb0] sm:$0xff]
    %v127 = vld [vmem:[%s2 + $0xb8] sm:$0xff]
    %v128 = vld [vmem:[%s2 + $0xc0] sm:$0xff]
    %v129 = vld [vmem:[%s2 + $0xc8] sm:$0xff]
    %v130 = vld [vmem:[%s2 + $0xd0] sm:$0xff]
    %v131 = vld [vmem:[%s2 + $0xd8] sm:$0xff]
    %v132 = vld [vmem:[%s2 + $0xe0] sm:$0xff]
    %v133 = vld [vmem:[%s2 + $0xe8] sm:$0xff]
    %v134 = vld [vmem:[%s2 + $0xf0] sm:$0xff]
    %v135 = vld [vmem:[%s2 + $0xf8] sm:$0xff]
    %136 = vmatpush.msra.mxu0 %v134
    %137 = vmatpush.msra.mxu0 %v132
    %138 = vmatpush.msra.mxu0 %v130
    %139 = vmatpush.msra.mxu0 %v128
    %140 = vmatpush.msra.mxu0 %v126
    %141 = vmatpush.msra.mxu0 %v124
    %142 = vmatpush.msra.mxu0 %v122
    %143 = vmatpush.msra.mxu0 %v120
    %144 = vmatpush.msra.mxu0 %v118
    %145 = vmatpush.msra.mxu0 %v116
    %146 = vmatpush.msra.mxu0 %v114
    %147 = vmatpush.msra.mxu0 %v112
    %148 = vmatpush.msra.mxu0 %v110
    %149 = vmatpush.msra.mxu0 %v108
    %150 = vmatpush.msra.mxu0 %v106
    %151 = vmatpush.msra.mxu0 %v104
    %152 = vmatmul.f32.gmra.mxu0 %v24
    %v153 = vpop.f32.mrf.mxu0
    %v154 = vadd.f32 0.0, %v153
    %155 = vmatmul.f32.gmra.mxu0 %v25
    %v156 = vpop.f32.mrf.mxu0
    %v157 = vadd.f32 0.0, %v156
    %158 = vdwg.mxu0
    %159 = vmatpush.msra.mxu0 %v135
    %160 = vmatpush.msra.mxu0 %v133
    %161 = vmatpush.msra.mxu0 %v131
    %162 = vmatpush.msra.mxu0 %v129
    %163 = vmatpush.msra.mxu0 %v127
    %164 = vmatpush.msra.mxu0 %v125
    %165 = vmatpush.msra.mxu0 %v123
    %166 = vmatpush.msra.mxu0 %v121
    %167 = vmatpush.msra.mxu0 %v119
    %168 = vmatpush.msra.mxu0 %v117
    %169 = vmatpush.msra.mxu0 %v115
    %170 = vmatpush.msra.mxu0 %v113
    %171 = vmatpush.msra.mxu0 %v111
    %172 = vmatpush.msra.mxu0 %v109
    %173 = vmatpush.msra.mxu0 %v107
    %174 = vmatpush.msra.mxu0 %v105
    %175 = vmatmul.f32.gmra.mxu0 %v24
    %v176 = vpop.f32.mrf.mxu0
    %v177 = vadd.f32 0.0, %v176
    %178 = vmatmul.f32.gmra.mxu0 %v25
    %v179 = vpop.f32.mrf.mxu0
    %v180 = vadd.f32 0.0, %v179
    %181 = vdwg.mxu0
    %v182 = vxor.u32 %v76, 2147483648
    %v183 = vxor.u32 %v99, 2147483648
    %v184 = vxor.u32 %v79, 2147483648
    %v185 = vxor.u32 %v102, 2147483648
    %v186 = vmul.f32 %v182, 1.442695
    %v187 = vpow.pop %v186
    %v188 = vmul.f32 %v183, 1.442695
    %v189 = vpow.pop %v188
    %v190 = vmul.f32 %v184, 1.442695
    %v191 = vpow.pop %v190
    %v192 = vmul.f32 %v185, 1.442695
    %v193 = vpow.pop %v192
    %v194 = vadd.f32 %v187, 1.0
    %v195 = vadd.f32 %v189, 1.0
    %v196 = vadd.f32 %v191, 1.0
    %v197 = vadd.f32 %v193, 1.0
    %v198 = vrcp.pop %v194
    %v199 = vmul.f32 %v194, %v198
    %v200 = vsub.f32 1.0, %v199
    %v201 = vmul.f32 %v198, %v200
    %v202 = vadd.f32 %v198, %v201
    %vm203 = vweird.f32 %v194
    %vm204 = vweird.f32 %v198
    %vm205 = vmor %vm203, %vm204
    %v206 = vsel %vm205, %v198, %v202
    %v207 = vand.u32 2147483647, %v194
    %vm208 = vcmp.eq.f32.partialorder %v207, 8.507059e+37
    %v209 = vand.u32 %v194, 2147483648
    %v210 = vor.u32 1.1754944e-38, %v209
    %v211 = vsel %vm208, %v210, %v206
    %v212 = vmul.f32 1.0, %v211
    %v213 = vrcp.pop %v195
    %v214 = vmul.f32 %v195, %v213
    %v215 = vsub.f32 1.0, %v214
    %v216 = vmul.f32 %v213, %v215
    %v217 = vadd.f32 %v213, %v216
    %vm218 = vweird.f32 %v195
    %vm219 = vweird.f32 %v213
    %vm220 = vmor %vm218, %vm219
    %v221 = vsel %vm220, %v213, %v217
    %v222 = vand.u32 2147483647, %v195
    %vm223 = vcmp.eq.f32.partialorder %v222, 8.507059e+37
    %v224 = vand.u32 %v195, 2147483648
    %v225 = vor.u32 1.1754944e-38, %v224
    %v226 = vsel %vm223, %v225, %v221
    %v227 = vmul.f32 1.0, %v226
    %v228 = vrcp.pop %v196
    %v229 = vmul.f32 %v196, %v228
    %v230 = vsub.f32 1.0, %v229
    %v231 = vmul.f32 %v228, %v230
    %v232 = vadd.f32 %v228, %v231
    %vm233 = vweird.f32 %v196
    %vm234 = vweird.f32 %v228
    %vm235 = vmor %vm233, %vm234
    %v236 = vsel %vm235, %v228, %v232
    %v237 = vand.u32 2147483647, %v196
    %vm238 = vcmp.eq.f32.partialorder %v237, 8.507059e+37
    %v239 = vand.u32 %v196, 2147483648
    %v240 = vor.u32 1.1754944e-38, %v239
    %v241 = vsel %vm238, %v240, %v236
    %v242 = vmul.f32 1.0, %v241
    %v243 = vrcp.pop %v197
    %v244 = vmul.f32 %v197, %v243
    %v245 = vsub.f32 1.0, %v244
    %v246 = vmul.f32 %v243, %v245
    %v247 = vadd.f32 %v243, %v246
    %vm248 = vweird.f32 %v197
    %vm249 = vweird.f32 %v243
    %vm250 = vmor %vm248, %vm249
    %v251 = vsel %vm250, %v243, %v247
    %v252 = vand.u32 2147483647, %v197
    %vm253 = vcmp.eq.f32.partialorder %v252, 8.507059e+37
    %v254 = vand.u32 %v197, 2147483648
    %v255 = vor.u32 1.1754944e-38, %v254
    %v256 = vsel %vm253, %v255, %v251
    %v257 = vmul.f32 1.0, %v256
    %v258 = vmul.f32 %v76, %v212
    %v259 = vmul.f32 %v99, %v227
    %v260 = vmul.f32 %v79, %v242
    %v261 = vmul.f32 %v102, %v257
    %v262 = vmul.f32 %v258, %v154
    %v263 = vmul.f32 %v259, %v177
    %v264 = vmul.f32 %v260, %v157
    %v265 = vmul.f32 %v261, %v180
    %v266 = vld [vmem:[#allocation2] sm:$0xff]
    %v267 = vld [vmem:[#allocation2 + $0x8] sm:$0xff]
    %v268 = vld [vmem:[%s3] sm:$0xff]
    %v269 = vld [vmem:[%s3 + $0x8] sm:$0xff]
    %v270 = vld [vmem:[%s3 + $0x10] sm:$0xff]
    %v271 = vld [vmem:[%s3 + $0x18] sm:$0xff]
    %v272 = vld [vmem:[%s3 + $0x20] sm:$0xff]
    %v273 = vld [vmem:[%s3 + $0x28] sm:$0xff]
    %v274 = vld [vmem:[%s3 + $0x30] sm:$0xff]
    %v275 = vld [vmem:[%s3 + $0x38] sm:$0xff]
    %v276 = vld [vmem:[%s3 + $0x40] sm:$0xff]
    %v277 = vld [vmem:[%s3 + $0x48] sm:$0xff]
    %v278 = vld [vmem:[%s3 + $0x50] sm:$0xff]
    %v279 = vld [vmem:[%s3 + $0x58] sm:$0xff]
    %v280 = vld [vmem:[%s3 + $0x60] sm:$0xff]
    %v281 = vld [vmem:[%s3 + $0x68] sm:$0xff]
    %v282 = vld [vmem:[%s3 + $0x70] sm:$0xff]
    %v283 = vld [vmem:[%s3 + $0x78] sm:$0xff]
    %v284 = vld [vmem:[%s3 + $0x80] sm:$0xff]
    %v285 = vld [vmem:[%s3 + $0x88] sm:$0xff]
    %v286 = vld [vmem:[%s3 + $0x90] sm:$0xff]
    %v287 = vld [vmem:[%s3 + $0x98] sm:$0xff]
    %v288 = vld [vmem:[%s3 + $0xa0] sm:$0xff]
    %v289 = vld [vmem:[%s3 + $0xa8] sm:$0xff]
    %v290 = vld [vmem:[%s3 + $0xb0] sm:$0xff]
    %v291 = vld [vmem:[%s3 + $0xb8] sm:$0xff]
    %v292 = vld [vmem:[%s3 + $0xc0] sm:$0xff]
    %v293 = vld [vmem:[%s3 + $0xc8] sm:$0xff]
    %v294 = vld [vmem:[%s3 + $0xd0] sm:$0xff]
    %v295 = vld [vmem:[%s3 + $0xd8] sm:$0xff]
    %v296 = vld [vmem:[%s3 + $0xe0] sm:$0xff]
    %v297 = vld [vmem:[%s3 + $0xe8] sm:$0xff]
    %v298 = vld [vmem:[%s3 + $0xf0] sm:$0xff]
    %v299 = vld [vmem:[%s3 + $0xf8] sm:$0xff]
    %300 = vmatpush.msra.mxu0 %v283
    %301 = vmatpush.msra.mxu0 %v282
    %302 = vmatpush.msra.mxu0 %v281
    %303 = vmatpush.msra.mxu0 %v280
    %304 = vmatpush.msra.mxu0 %v279
    %305 = vmatpush.msra.mxu0 %v278
    %306 = vmatpush.msra.mxu0 %v277
    %307 = vmatpush.msra.mxu0 %v276
    %308 = vmatpush.msra.mxu0 %v275
    %309 = vmatpush.msra.mxu0 %v274
    %310 = vmatpush.msra.mxu0 %v273
    %311 = vmatpush.msra.mxu0 %v272
    %312 = vmatpush.msra.mxu0 %v271
    %313 = vmatpush.msra.mxu0 %v270
    %314 = vmatpush.msra.mxu0 %v269
    %315 = vmatpush.msra.mxu0 %v268
    %316 = vmatmul.f32.gmra.mxu0 %v262
    %v317 = vpop.f32.mrf.mxu0
    %v318 = vadd.f32 0.0, %v317
    %319 = vmatmul.f32.gmra.mxu0 %v264
    %v320 = vpop.f32.mrf.mxu0
    %v321 = vadd.f32 0.0, %v320
    %322 = vdwg.mxu0
    %323 = vmatpush.msra.mxu0 %v299
    %324 = vmatpush.msra.mxu0 %v298
    %325 = vmatpush.msra.mxu0 %v297
    %326 = vmatpush.msra.mxu0 %v296
    %327 = vmatpush.msra.mxu0 %v295
    %328 = vmatpush.msra.mxu0 %v294
    %329 = vmatpush.msra.mxu0 %v293
    %330 = vmatpush.msra.mxu0 %v292
    %331 = vmatpush.msra.mxu0 %v291
    %332 = vmatpush.msra.mxu0 %v290
    %333 = vmatpush.msra.mxu0 %v289
    %334 = vmatpush.msra.mxu0 %v288
    %335 = vmatpush.msra.mxu0 %v287
    %336 = vmatpush.msra.mxu0 %v286
    %337 = vmatpush.msra.mxu0 %v285
    %338 = vmatpush.msra.mxu0 %v284
    %339 = vmatmul.f32.gmra.mxu0 %v263
    %v340 = vpop.f32.mrf.mxu0
    %v341 = vadd.f32 %v318, %v340
    %342 = vmatmul.f32.gmra.mxu0 %v265
    %v343 = vpop.f32.mrf.mxu0
    %v344 = vadd.f32 %v321, %v343
    %345 = vdwg.mxu0
    %v346 = vadd.f32 %v266, %v341
    %v347 = vadd.f32 %v267, %v344
    %348 = vst [vmem:[#allocation2] sm:$0xff] %v346
    %349 = vst [vmem:[#allocation2 + $0x8] sm:$0xff] %v347
    // Predicated region
    $region22: #{swiglu.1} parent=1 // pred_check
      %p350 = pneg %p18
    $region23: #{swiglu.1} parent=1 // pred_check_branch
      %352 = sbr.rel (%p350) target = $region25
    $region24: #{swiglu.1} parent=1 // pred_region
      %v353 = vld [vmem:[#allocation2] sm:$0xff]
      %v354 = vld [vmem:[#allocation2 + $0x8] sm:$0xff]
      %355 = vst [vmem:[#allocation3] sm:$0xff] %v353
      %356 = vst [vmem:[#allocation3 + $0x8] sm:$0xff] %v354
    $region25: #{swiglu.1} parent=1 // pred_fallthru
      _
    // Predicated region
    $region26: #{swiglu.1} parent=1 // pred_check
      _
    $region27: #{swiglu.1} parent=1 // pred_check_branch
      %358 = sbr.rel (0) target = $region29
    $region28: #{swiglu.1} parent=1 // pred_region
      %360 = vsyncadd [#allocation4], 0
      %s361 = sshll.u32 [#allocation3], 4
      %s362 = int_to_ptr.vmem [resolvable:$true] %s361
      %s363 = sshll.u32 %s4, 4
      %s364 = int_to_ptr.hbm [resolvable:$true] %s363
      %369 = dma.vmem_to_hbm [thread:$0]  %s362, 256, %s364, [#allocation4], 128, 128, 8
    $region29: #{swiglu.1} parent=1 // pred_fallthru
      _
    // Predicated region
    $region30: #{swiglu.1} parent=1 // pred_check
      _
    $region31: #{swiglu.1} parent=1 // pred_check_branch
      %371 = sbr.rel (0) target = $region33
    $region32: #{swiglu.1} parent=1 // pred_region
      %373 = dma.done [#allocation4], 256
    $region33: #{swiglu.1} parent=1 // pred_fallthru
      _
    %374 = vsyncpa [#allocation4], 1

</llo_original>
